<compile_context>
chip_gen: v5e
topology: v5e:2x2
jax: 0.10.0
libtpu: 0.0.40
codegen_flags: <defaults>
</compile_context>

<pallas_src>
import jax
import jax.numpy as jnp
from jax import lax
from jax.experimental import pallas as pl
from jax.experimental.pallas import tpu as pltpu


# ---------------------------------------------------------------------------
# Kernels
# ---------------------------------------------------------------------------
def _query_kernel_single_k(x_ref, w_ref, o_ref):
    """out_tile = x_tile @ W^T, full reduction in one step (no scratch).

    x_ref: [TM, K]   activation tile
    w_ref: [N,  K]   weight (native PyTorch layout, NOT transposed)
    o_ref: [TM, N]   output tile
    """
    o_ref[...] = lax.dot_general(
        x_ref[...],
        w_ref[...],
        dimension_numbers=(((1,), (1,)), ((), ())),  # contract last dims == x @ W^T
        preferred_element_type=jnp.float32,
    ).astype(o_ref.dtype)


def _query_kernel_tiled_k(x_ref, w_ref, o_ref, acc_ref):
    """One (M-tile, K-tile) step of out = x @ W^T with f32 accumulation.

    x_ref:   [TM, TK]  activation tile
    w_ref:   [N,  TK]  weight tile (native layout)
    o_ref:   [TM, N]   output tile (written on the last K step)
    acc_ref: [TM, N]   f32 accumulator, resident across the K axis
    """
    k = pl.program_id(1)

    partial = lax.dot_general(
        x_ref[...],
        w_ref[...],
        dimension_numbers=(((1,), (1,)), ((), ())),
        preferred_element_type=jnp.float32,
    )

    @pl.when(k == 0)
    def _():
        acc_ref[...] = partial          # init with first product, no zero-fill

    @pl.when(k != 0)
    def _():
        acc_ref[...] += partial

    @pl.when(k == pl.num_programs(1) - 1)
    def _():
        o_ref[...] = acc_ref[...].astype(o_ref.dtype)


# ---------------------------------------------------------------------------
# Tile selection (byte-budget driven)
# ---------------------------------------------------------------------------
def _footprint(block_m, block_k, n, itemsize, k_tiled):
    x_bytes = 2 * block_m * block_k * itemsize      # double-buffered activations
    w_bytes = 2 * n * block_k * itemsize            # double-buffered weight tile
    o_bytes = 2 * block_m * n * itemsize            # double-buffered output tile
    acc_bytes = block_m * n * 4 if k_tiled else 0   # f32 accumulator
    return x_bytes + w_bytes + o_bytes + acc_bytes


def _k_block_candidates(dim_input):
    """Exact divisors of dim_input that are multiples of 128, descending (< full)."""
    cands = []
    if dim_input % 128 == 0:
        n128 = dim_input // 128
        for d in range(n128 - 1, 0, -1):
            if n128 % d == 0:
                cands.append(d * 128)
    return cands


def _choose_tiles(m, dim_input, n, itemsize, *, tm, budget):
    tm_aligned = max(8, (tm // 8) * 8)

    # Preferred M tile: large for pipelining, but >= 2 tiles (megacore) when cheap.
    if m > tm_aligned:
        m_pref = tm_aligned
    elif m >= 16 and m % 16 == 0:
        m_pref = min(tm_aligned, m // 2)
    else:
        m_pref = m

    def shrink_m(mp, block_k, k_tiled):
        bm = mp
        while bm > 8 and _footprint(bm, block_k, n, itemsize, k_tiled) > budget:
            bm = max(8, ((bm // 2 + 7) // 8) * 8)
        return bm

    # Prefer NO K tiling: weight index_map is then constant, so it is DMA'd once
    # and stays VMEM-resident while activations stream.
    bm = shrink_m(m_pref, dim_input, False)
    if _footprint(bm, dim_input, n, itemsize, False) <= budget:
        return bm, dim_input

    # Fall back to K tiling with an exact-divisor block (no remainder hazard).
    for bk in _k_block_candidates(dim_input):
        bm = shrink_m(m_pref, bk, True)
        if _footprint(bm, bk, n, itemsize, True) <= budget:
            return bm, bk

    # Last resort: minimal tiles.
    bks = _k_block_candidates(dim_input)
    bk = bks[-1] if bks else dim_input
    bm = m_pref if m_pref <= 8 else 8
    return bm, bk


# ---------------------------------------------------------------------------
# Wrapper
# ---------------------------------------------------------------------------
def query_forward(x, w, *, tm=1024, vmem_budget=32 * 1024 * 1024):
    """x: [batch, seq, dim_input], w: [dim_attn, dim_input] -> [batch, seq, dim_attn]."""
    batch, seq, dim_input = x.shape
    dim_attn = w.shape[0]
    m = batch * seq
    itemsize = jnp.dtype(x.dtype).itemsize

    x2d = x.reshape(m, dim_input)

    # Lane-dense output: pad dim_attn to a multiple of 128 only if overhead <= 25%.
    n_pad = (-dim_attn) % 128
    pad_out = 0 < n_pad <= max(dim_attn // 4, 0)
    if pad_out:
        w_k = jnp.pad(w, ((0, n_pad), (0, 0)))
        n = dim_attn + n_pad
    else:
        w_k = w
        n = dim_attn

    block_m, block_k = _choose_tiles(m, dim_input, n, itemsize, tm=tm, budget=vmem_budget)
    k_tiled = block_k != dim_input
    grid_m = pl.cdiv(m, block_m)
    grid_k = dim_input // block_k if k_tiled else 1  # block_k divides dim_input exactly

    # Cost estimate: weight is re-read once per M tile only when K is tiled.
    weight_reads = (grid_m if k_tiled else 1) * n * dim_input
    cost = pl.CostEstimate(
        flops=2 * m * n * dim_input,
        transcendentals=0,
        bytes_accessed=(m * dim_input + weight_reads + m * n) * itemsize,
    )

    fp = _footprint(block_m, block_k, n, itemsize, k_tiled)
    vmem_limit = min(max(int(1.5 * fp), 32 * 1024 * 1024), 56 * 1024 * 1024)

    if not k_tiled:
        out2d = pl.pallas_call(
            _query_kernel_single_k,
            out_shape=jax.ShapeDtypeStruct((m, n), x.dtype),
            grid_spec=pltpu.PrefetchScalarGridSpec(
                num_scalar_prefetch=0,
                grid=(grid_m,),
                in_specs=[
                    pl.BlockSpec((block_m, dim_input), lambda i: (i, 0)),
                    # Constant index map -> weight DMA'd once, VMEM-resident.
                    pl.BlockSpec((n, dim_input), lambda i: (0, 0)),
                ],
                out_specs=pl.BlockSpec((block_m, n), lambda i: (i, 0)),
            ),
            compiler_params=pltpu.CompilerParams(
                dimension_semantics=("parallel",),
                vmem_limit_bytes=vmem_limit,
            ),
            cost_estimate=cost,
        )(x2d, w_k)
    else:
        out2d = pl.pallas_call(
            _query_kernel_tiled_k,
            out_shape=jax.ShapeDtypeStruct((m, n), x.dtype),
            grid_spec=pltpu.PrefetchScalarGridSpec(
                num_scalar_prefetch=0,
                grid=(grid_m, grid_k),
                in_specs=[
                    pl.BlockSpec((block_m, block_k), lambda i, k: (i, k)),
                    pl.BlockSpec((n, block_k), lambda i, k: (0, k)),
                ],
                out_specs=pl.BlockSpec((block_m, n), lambda i, k: (i, 0)),
                scratch_shapes=[pltpu.VMEM((block_m, n), jnp.float32)],
            ),
            compiler_params=pltpu.CompilerParams(
                # M is embarrassingly parallel; K is the carried reduction.
                dimension_semantics=("parallel", "arbitrary"),
                vmem_limit_bytes=vmem_limit,
            ),
            cost_estimate=cost,
        )(x2d, w_k)

    if pad_out:
        out2d = out2d[:, :dim_attn]
    return out2d.reshape(batch, seq, dim_attn)


if __name__ == "__main__":
    # Small shapes consistent with the module: Linear(dim_input -> dim_attn, bias=False)
    batch, seq = 2, 8
    dim_input, dim_attn = 32, 32

    key = jax.random.PRNGKey(0)
    kx, kw = jax.random.split(key)

    x = jax.random.normal(kx, (batch, seq, dim_input), dtype=jnp.float32)
    # Deterministic weight init (PyTorch-style uniform bound 1/sqrt(dim_input)).
    bound = 1.0 / (dim_input ** 0.5)
    w = jax.random.uniform(
        kw, (dim_attn, dim_input), dtype=jnp.float32, minval=-bound, maxval=bound
    )

    out = query_forward(x, w)
    out = jax.block_until_ready(out)

    # Sanity check against a plain-JAX reference (x @ W^T).
    ref = jnp.einsum("bsd,ad->bsa", x, w)
    assert out.shape == (batch, seq, dim_attn)
    assert jnp.allclose(out, ref, atol=1e-5, rtol=1e-5)

    print("KERNEL_OK")
</pallas_src>

<mosaic_0001>
module attributes {stable_mosaic.version = 11 : i64} {
  func.func @_query_kernel_single_k(%arg0: i32, %arg1: memref<8x32xf32, #tpu.memory_space<vmem>>, %arg2: memref<32x32xf32, #tpu.memory_space<vmem>>, %arg3: memref<8x32xf32, #tpu.memory_space<vmem>>) attributes {dimension_semantics = [#tpu.dimension_semantics<parallel>], iteration_bounds = array<i64: 2>, scalar_prefetch = 0 : i64, scratch_operands = 0 : i64, tpu.core_type = #tpu.core_type<tc>, window_params = [{transform_indices = @transform_0, window_bounds = array<i64: 8, 32>}, {pipeline_mode = #tpu.pipeline_mode<synchronous>, transform_indices = @transform_1, window_bounds = array<i64: 32, 32>}, {transform_indices = @transform_2, window_bounds = array<i64: 8, 32>}]} {
    %c0 = arith.constant 0 : index
    %c0_0 = arith.constant 0 : index
    %0 = vector.load %arg1[%c0, %c0_0] : memref<8x32xf32, #tpu.memory_space<vmem>>, vector<8x32xf32>
    %c0_1 = arith.constant 0 : index
    %c0_2 = arith.constant 0 : index
    %1 = vector.load %arg2[%c0_1, %c0_2] : memref<32x32xf32, #tpu.memory_space<vmem>>, vector<32x32xf32>
    %cst = arith.constant dense<0.000000e+00> : vector<8x32xf32>
    %2 = tpu.matmul %0, %1, %cst {dimension_numbers = #tpu.dot_dimension_numbers<[1], [1], [0], [0], [0, 0, 1, 0], [], []>} : vector<8x32xf32>, vector<32x32xf32>, vector<8x32xf32> -> vector<8x32xf32>
    %c0_3 = arith.constant 0 : index
    %c0_4 = arith.constant 0 : index
    %3 = vector.load %arg3[%c0_3, %c0_4] : memref<8x32xf32, #tpu.memory_space<vmem>>, vector<8x32xf32>
    tpu.vector_store %arg3[%c0_3, %c0_4], %2 {strides = array<i32>} : memref<8x32xf32, #tpu.memory_space<vmem>>, vector<8x32xf32>,
    return
  }
  func.func @transform_0(%arg0: i32) -> (i32, i32) {
    %c0_i32 = arith.constant 0 : i32
    %c0_i32_0 = arith.constant 0 : i32
    return %arg0, %c0_i32 : i32, i32
  }
  func.func @transform_1(%arg0: i32) -> (i32, i32) {
    %c0_i32 = arith.constant 0 : i32
    %c0_i32_0 = arith.constant 0 : i32
    %c0_i32_1 = arith.constant 0 : i32
    return %c0_i32, %c0_i32_0 : i32, i32
  }
  func.func @transform_2(%arg0: i32) -> (i32, i32) {
    %c0_i32 = arith.constant 0 : i32
    %c0_i32_0 = arith.constant 0 : i32
    return %arg0, %c0_i32 : i32, i32
  }
}

</mosaic_0001>

<llo_original>
// kernel: tpu_custom_call.1
$region0: #{tpu_custom_call.1}
  #allocation0 [shape = 'u32[]', space=smem, size = 0x4, offset = 0x4, fixed_abs, tag = 'smem constant byte address 0x4 - core index']
  #allocation1 [shape = 'u32[72,128]{1,0:T(1,128)}', space=vmem, size = 0x9000, scoped, tag = 'internal scratch']
  %s0 = inlined_call_operand.hbm [shape: f32[16,32], index: 0, kind: input, shape index: {}]
  %s1 = inlined_call_operand.hbm [shape: f32[32,32], index: 1, kind: input, shape index: {}]
  %s2 = inlined_call_operand.hbm [shape: f32[16,32], index: 2, kind: output, shape index: {}]
  %s3 = sld [smem:[#allocation0]]
  $region49: #{tpu_custom_call.1} parent=0
    _
  %s5 = ssub.s32 1, %s3
  %s6 = scalar_select 0, %s5, %s3
  $region1: #{tpu_custom_call.1} parent=0
    #allocation2 [shape = 'u8[8192]{0}', space=vmem, size = 0x2000, scoped, tag = 'input window, operand 0']
    #allocation3 [shape = 's32[2]{0}', space=sflag, size = 0x8, scoped, tag = 'scoped memory for tpu_custom_call.1']
    #allocation4 [shape = 's32[2]{0}', space=sflag, size = 0x8, scoped, tag = 'scoped memory for tpu_custom_call.1']
    #allocation5 [shape = 'u8[16384]{0}', space=vmem, size = 0x4000, scoped, tag = 'input window, operand 1, single buffered']
    #allocation6 [shape = 's32[1]{0}', space=sflag, size = 0x4, scoped, tag = 'scoped memory for tpu_custom_call.1']
    #allocation7 [shape = 'u8[8192]{0}', space=vmem, size = 0x2000, scoped, tag = 'output window, operand 0']
    %7 = vsyncpa [#allocation3], 0
    %s8 = scalar_lea.sflag [#allocation3], 1
    %9 = vsyncpa %s8, 0
    %10 = vsyncpa [#allocation6], 0
    %11 = vsyncpa [#allocation4], 0
    %s12 = scalar_lea.sflag [#allocation4], 1
    %13 = vsyncpa %s12, 0
    loop: start=0, step=1, limit=4
    $region2: #{tpu_custom_call.1} parent=1 // loop_pre_header
      _
    $region3: #{tpu_custom_call.1} parent=1 // loop_header
      %s15 = sphi 0, %s19
      %p16 = scmp.ge.s32.totalorder %s15, 4
      %s25 = sphi 0, %s27
      %s28 = sphi 0, %s25
      %s29 = sphi 0, %s28
      %s45 = sphi 0, %s29
      %s49 = sphi 0, %s49
      %s51 = sphi 0, %s49
      %s52 = sphi 0, %s51
      %s66 = sphi 0, %s52
      %s72 = sphi 0, %s74
      %s75 = sphi 0, %s72
      %s76 = sphi 0, %s75
      %s92 = sphi 0, %s76
    $region4: #{tpu_custom_call.1} parent=1 // loop_header_branch
      %18 = sbr.rel (%p16) target = $region8
    $region5: #{tpu_custom_call.1} parent=1 // loop_body
      %s20 = ssub.s32 %s15, 1
      %s21 = ssub.s32 %s15, 2
      %s22 = sadd.s32 %s15, 1
      %s23 = ssub.s32 %s15, %s22
      %p24 = scmp.eq.s32.totalorder %s23, 0
      %s26 = sadd.s32 %s25, 1
      %s27 = scalar_select %p24, %s25, %s26
      %p30 = pneg %p24
      %p31 = scmp.eq.s32.totalorder %s15, 1
      %p32 = por %p30, %p31
      %p33 = scmp.ne.s32.totalorder %s25, %s28
      %p34 = scmp.eq.s32.totalorder %s15, 0
      %p35 = por %p33, %p34
      %p36 = scmp.ne.s32.totalorder %s25, %s28
      %p37 = scmp.eq.s32.totalorder %s20, 1
      %p38 = por %p36, %p37
      %p39 = scmp.ne.s32.totalorder %s28, %s29
      %p40 = scmp.eq.s32.totalorder %s20, 0
      %p41 = por %p39, %p40
      %p42 = scmp.ne.s32.totalorder %s28, %s29
      %p43 = scmp.eq.s32.totalorder %s21, 1
      %p44 = por %p42, %p43
      %p46 = scmp.ne.s32.totalorder %s29, %s45
      %p47 = scmp.eq.s32.totalorder %s21, 0
      %p48 = por %p46, %p47
      %s50 = sadd.s32 %s49, 1
      %p53 = scmp.eq.s32.totalorder %s15, 1
      %p54 = scmp.ne.s32.totalorder %s49, %s51
      %p55 = scmp.eq.s32.totalorder %s15, 0
      %p56 = por %p54, %p55
      %p57 = scmp.ne.s32.totalorder %s49, %s51
      %p58 = scmp.eq.s32.totalorder %s20, 1
      %p59 = por %p57, %p58
      %p60 = scmp.ne.s32.totalorder %s51, %s52
      %p61 = scmp.eq.s32.totalorder %s20, 0
      %p62 = por %p60, %p61
      %p63 = scmp.ne.s32.totalorder %s51, %s52
      %p64 = scmp.eq.s32.totalorder %s21, 1
      %p65 = por %p63, %p64
      %p67 = scmp.ne.s32.totalorder %s52, %s66
      %p68 = scmp.eq.s32.totalorder %s21, 0
      %p69 = por %p67, %p68
      %s70 = ssub.s32 %s15, %s22
      %p71 = scmp.eq.s32.totalorder %s70, 0
      %s73 = sadd.s32 %s72, 1
      %s74 = scalar_select %p71, %s72, %s73
      %p77 = pneg %p71
      %p78 = scmp.eq.s32.totalorder %s15, 1
      %p79 = por %p77, %p78
      %p80 = scmp.ne.s32.totalorder %s72, %s75
      %p81 = scmp.eq.s32.totalorder %s15, 0
      %p82 = por %p80, %p81
      %p83 = scmp.ne.s32.totalorder %s72, %s75
      %p84 = scmp.eq.s32.totalorder %s20, 1
      %p85 = por %p83, %p84
      %p86 = scmp.ne.s32.totalorder %s75, %s76
      %p87 = scmp.eq.s32.totalorder %s20, 0
      %p88 = por %p86, %p87
      %p89 = scmp.ne.s32.totalorder %s75, %s76
      %p90 = scmp.eq.s32.totalorder %s21, 1
      %p91 = por %p89, %p90
      %p93 = scmp.ne.s32.totalorder %s76, %s92
      %p94 = scmp.eq.s32.totalorder %s21, 0
      %p95 = por %p93, %p94
      %p96 = scmp.le.s32.totalorder 1, %s15
      %p97 = scmp.lt.s32.totalorder %s15, 3
      %p98 = pnand %p96, %p97
      %p99 = pneg %p98
      // Predicated region
      $region9: #{tpu_custom_call.1} parent=5 // pred_check
        _
      $region10: #{tpu_custom_call.1} parent=5 // pred_check_branch
        %101 = sbr.rel (%p98) target = $region12
      $region11: #{tpu_custom_call.1} parent=5 // pred_region
        %s102 = ssub.s32 %s15, 1
        // Predicated region
        $region13: #{tpu_custom_call.1} parent=11 // pred_check
          %p103 = pneg %p62
        $region14: #{tpu_custom_call.1} parent=11 // pred_check_branch
          %105 = sbr.rel (%p103) target = $region16
        $region15: #{tpu_custom_call.1} parent=11 // pred_region
          %107 = vsyncadd [#allocation6], 0
          %s108 = sshll.u32 %s1, 4
          %s109 = int_to_ptr.hbm [resolvable:$true] %s108
          %s110 = sshll.u32 [#allocation5], 4
          %s111 = int_to_ptr.vmem [resolvable:$true] %s110
          %116 = dma.hbm_to_vmem [thread:$0]  %s109, 512, %s111, [#allocation6], 128, 128, 8
        $region16: #{tpu_custom_call.1} parent=11 // pred_fallthru
          _
      $region12: #{tpu_custom_call.1} parent=5 // pred_fallthru
        _
      %p117 = scmp.lt.s32.totalorder %s15, 2
      // Predicated region
      $region17: #{tpu_custom_call.1} parent=5 // pred_check
        %p118 = pneg %p117
      $region18: #{tpu_custom_call.1} parent=5 // pred_check_branch
        %120 = sbr.rel (%p118) target = $region20
      $region19: #{tpu_custom_call.1} parent=5 // pred_region
        // Predicated region
        $region21: #{tpu_custom_call.1} parent=19 // pred_check
          %p121 = pneg %p35
        $region22: #{tpu_custom_call.1} parent=19 // pred_check_branch
          %123 = sbr.rel (%p121) target = $region24
        $region23: #{tpu_custom_call.1} parent=19 // pred_region
          %s124 = sand.u32 %s25, 1
          %s125 = scalar_lea.sflag [#allocation3], %s124
          %s126 = sand.u32 %s25, 1
          %s127 = smul.addr %s126, 8
          %s128 = scalar_lea.vmem [#allocation2], %s127
          %130 = vsyncadd %s125, 0
          %s131 = smul.addr %s15, 8
          %s132 = scalar_lea.hbm %s0, %s131
          %s134 = sshll.u32 %s132, 4
          %s135 = int_to_ptr.hbm [resolvable:$true] %s134
          %s136 = sshll.u32 %s128, 4
          %s137 = int_to_ptr.vmem [resolvable:$true] %s136
          %139 = dma.hbm_to_vmem [thread:$0]  %s135, 128, %s137, %s125
        $region24: #{tpu_custom_call.1} parent=19 // pred_fallthru
          _
      $region20: #{tpu_custom_call.1} parent=5 // pred_fallthru
        _
      %p140 = scmp.le.s32.totalorder 1, %s15
      %p141 = scmp.lt.s32.totalorder %s15, 3
      %p142 = pnand %p140, %p141
      %p143 = pneg %p142
      // Predicated region
      $region25: #{tpu_custom_call.1} parent=5 // pred_check
        _
      $region26: #{tpu_custom_call.1} parent=5 // pred_check_branch
        %145 = sbr.rel (%p142) target = $region28
      $region27: #{tpu_custom_call.1} parent=5 // pred_region
        %s146 = ssub.s32 %s15, 1
        %s147 = sand.u32 %s28, 1
        %s148 = scalar_lea.sflag [#allocation3], %s147
        %s149 = sand.u32 %s28, 1
        %s150 = smul.addr %s149, 8
        %s151 = scalar_lea.vmem [#allocation2], %s150
        // Predicated region
        $region29: #{tpu_custom_call.1} parent=27 // pred_check
          %p152 = pneg %p41
        $region30: #{tpu_custom_call.1} parent=27 // pred_check_branch
          %154 = sbr.rel (%p152) target = $region32
        $region31: #{tpu_custom_call.1} parent=27 // pred_region
          %156 = dma.done %s148, 128
        $region32: #{tpu_custom_call.1} parent=27 // pred_fallthru
          _
        // Predicated region
        $region33: #{tpu_custom_call.1} parent=27 // pred_check
          %p157 = pneg %p62
        $region34: #{tpu_custom_call.1} parent=27 // pred_check_branch
          %159 = sbr.rel (%p157) target = $region36
        $region35: #{tpu_custom_call.1} parent=27 // pred_region
          %161 = dma.done [#allocation6], 512
        $region36: #{tpu_custom_call.1} parent=27 // pred_fallthru
          _
        %s162 = sand.u32 %s28, 1
        %s163 = scalar_lea.sflag [#allocation3], %s162
        %s164 = sand.u32 %s28, 1
        %s165 = smul.addr %s164, 8
        %s166 = scalar_lea.vmem [#allocation2], %s165
        %p167 = pneg %p41
        %p168 = pneg %p38
        %p169 = pneg %p62
        %p170 = pneg %p59
        %p171 = pneg %p88
        %p172 = pneg %p85
        %s173 = sand.u32 %s75, 1
        %s174 = scalar_lea.sflag [#allocation4], %s173
        %s175 = sand.u32 %s75, 1
        %s176 = smul.addr %s175, 8
        %s177 = scalar_lea.vmem [#allocation7], %s176
        %v178 = vld [vmem:[%s151] sm:$0xff]
        %v179 = vld [vmem:[#allocation5] sm:$0xff]
        %v180 = vld [vmem:[#allocation5 + $0x8] sm:$0xff]
        %v181 = vld [vmem:[#allocation5 + $0x10] sm:$0xff]
        %v182 = vld [vmem:[#allocation5 + $0x18] sm:$0xff]
        %vm183 = vcmask 261120
        %v185 = vsel %vm183, %v178, 0
        %v188 = vsel %vm183, %v179, 0
        %v191 = vsel %vm183, %v180, 0
        %v194 = vsel %vm183, %v181, 0
        %v197 = vsel %vm183, %v182, 0
        %199 = vmatpush.xpose.msra.mxu0 0.0
        %200 = vmatpush.xpose.msra.mxu0 0.0
        %201 = vmatpush.xpose.msra.mxu0 0.0
        %202 = vmatpush.xpose.msra.mxu0 0.0
        %203 = vmatpush.xpose.msra.mxu0 0.0
        %204 = vmatpush.xpose.msra.mxu0 0.0
        %205 = vmatpush.xpose.msra.mxu0 0.0
        %206 = vmatpush.xpose.msra.mxu0 0.0
        %207 = vmatpush.xpose.msra.mxu0 0.0
        %208 = vmatpush.xpose.msra.mxu0 0.0
        %209 = vmatpush.xpose.msra.mxu0 0.0
        %210 = vmatpush.xpose.msra.mxu0 0.0
        %211 = vmatpush.xpose.msra.mxu0 %v197
        %212 = vmatpush.xpose.msra.mxu0 %v194
        %213 = vmatpush.xpose.msra.mxu0 %v191
        %214 = vmatpush.xpose.msra.mxu0 %v188
        %215 = vmatmul.f32.gmra.mxu0 %v185
        %v216 = vpop.f32.mrf.mxu0
        %v217 = vadd.f32 0.0, %v216
        %218 = vdwg.mxu0
        %219 = vst.msk [vmem:[%s177] sm:$0xff] %vm183, %v217
        %s220 = sand.u32 %s75, 1
        %s221 = scalar_lea.sflag [#allocation4], %s220
        %s222 = sand.u32 %s75, 1
        %s223 = smul.addr %s222, 8
        %s224 = scalar_lea.vmem [#allocation7], %s223
        // Predicated region
        $region37: #{tpu_custom_call.1} parent=27 // pred_check
          %p225 = pneg %p85
        $region38: #{tpu_custom_call.1} parent=27 // pred_check_branch
          %227 = sbr.rel (%p225) target = $region40
        $region39: #{tpu_custom_call.1} parent=27 // pred_region
          %229 = vsyncadd %s221, 0
          %s230 = smul.addr %s20, 8
          %s231 = scalar_lea.hbm %s2, %s230
          %s233 = sshll.u32 %s224, 4
          %s234 = int_to_ptr.vmem [resolvable:$true] %s233
          %s235 = sshll.u32 %s231, 4
          %s236 = int_to_ptr.hbm [resolvable:$true] %s235
          %238 = dma.vmem_to_hbm [thread:$0]  %s234, 128, %s236, %s221
        $region40: #{tpu_custom_call.1} parent=27 // pred_fallthru
          _
      $region28: #{tpu_custom_call.1} parent=5 // pred_fallthru
        _
      %p239 = scmp.le.s32.totalorder 2, %s15
      // Predicated region
      $region41: #{tpu_custom_call.1} parent=5 // pred_check
        %p240 = pneg %p239
      $region42: #{tpu_custom_call.1} parent=5 // pred_check_branch
        %242 = sbr.rel (%p240) target = $region44
      $region43: #{tpu_custom_call.1} parent=5 // pred_region
        %s243 = ssub.s32 %s15, 2
        // Predicated region
        $region45: #{tpu_custom_call.1} parent=43 // pred_check
          %p244 = pneg %p91
        $region46: #{tpu_custom_call.1} parent=43 // pred_check_branch
          %246 = sbr.rel (%p244) target = $region48
        $region47: #{tpu_custom_call.1} parent=43 // pred_region
          %s247 = sand.u32 %s76, 1
          %s248 = scalar_lea.sflag [#allocation4], %s247
          %s249 = sand.u32 %s76, 1
          %s250 = smul.addr %s249, 8
          %s251 = scalar_lea.vmem [#allocation7], %s250
          %253 = dma.done %s248, 128
        $region48: #{tpu_custom_call.1} parent=43 // pred_fallthru
          _
      $region44: #{tpu_custom_call.1} parent=5 // pred_fallthru
        _
    $region6: #{tpu_custom_call.1} parent=1 // loop_footer
      %s19 = sadd.s32 1, %s15
    $region7: #{tpu_custom_call.1} parent=1 // loop_footer_branch
      %14 = sbr.rel target = $region3
    $region8: #{tpu_custom_call.1} parent=1 // loop_exit
      _
    %254 = vsyncpa [#allocation3], 1
    %s255 = scalar_lea.sflag [#allocation3], 1
    %256 = vsyncpa %s255, 1
    %257 = vsyncpa [#allocation6], 1
    %258 = vsyncpa [#allocation4], 1
    %s259 = scalar_lea.sflag [#allocation4], 1
    %260 = vsyncpa %s259, 1

</llo_original>
